<compile_context>
chip_gen: v5e
topology: v5e:2x2
jax: 0.10.0
libtpu: 0.0.40
codegen_flags: <defaults>
</compile_context>

<pallas_src>
import jax
import jax.numpy as jnp
from jax.experimental import pallas as pl
from jax.experimental.pallas import tpu as pltpu

FEATURE_DIM = 3 * 32 * 32        # 3072
NUM_CLASSES = 10
MAX_M_TILE = 1024                # rows of x per grid step (~28 MiB footprint)
MIN_SPLIT_ROWS = 512             # once B >= this, use >= 2 grid steps (v7x dual-TC)
VMEM_LIMIT_BYTES = 48 * 1024 * 1024   # safe on v5e/v6e (128 MiB) and v7x (64 MiB/TC)


def _round_up(n, m):
    return ((n + m - 1) // m) * m


def _choose_m_tile(batch):
    """Balanced, 8-aligned batch tile; partial last block handled by Pallas."""
    if batch <= 8:
        # Full-extent block along the batch dim (always layout-legal, exact fit).
        return max(batch, 1)
    n_tiles = pl.cdiv(batch, MAX_M_TILE)
    if batch >= MIN_SPLIT_ROWS:
        n_tiles = max(n_tiles, 2)          # keep both v7x TensorCores busy
    return min(MAX_M_TILE, _round_up(pl.cdiv(batch, n_tiles), 8))


def _fc8_kernel(x_ref, w_ref, b_ref, o_ref):
    """Single-pass y = x @ w + b for one batch tile (weight resident in VMEM)."""
    o_ref[...] = (
        jnp.dot(x_ref[...], w_ref[...], preferred_element_type=jnp.float32)
        + b_ref[...]
    ).astype(o_ref.dtype)


def pack_fc8_params(w8, b8):
    """One-time packing (NOT per forward): (10,3072)->(3072,10), (10,)->(1,10)."""
    return jnp.transpose(w8), b8.reshape(1, NUM_CLASSES)


@jax.jit
def cifar10_poisoned_lr_forward(x, wt, b):
    """x: (..., 3, 32, 32); wt: (3072, 10) pre-transposed fc8 weight; b: (1, 10)."""
    xf = x.reshape(-1, FEATURE_DIM)        # same as torch .reshape(-1, 3072)
    batch = xf.shape[0]
    m_tile = _choose_m_tile(batch)
    grid = (pl.cdiv(batch, m_tile),)       # partial last block: clipped DMA, no pad

    x_bytes = jnp.dtype(xf.dtype).itemsize
    w_bytes = jnp.dtype(wt.dtype).itemsize

    out = pl.pallas_call(
        _fc8_kernel,
        out_shape=jax.ShapeDtypeStruct((batch, NUM_CLASSES), jnp.float32),
        grid_spec=pltpu.PrefetchScalarGridSpec(
            num_scalar_prefetch=0,
            grid=grid,
            in_specs=[
                # x batch tile, streamed per grid step.
                pl.BlockSpec((m_tile, FEATURE_DIM), lambda i: (i, 0)),
                # full weight, resident across the whole grid (constant index_map).
                pl.BlockSpec((FEATURE_DIM, NUM_CLASSES), lambda i: (0, 0)),
                # bias, resident.
                pl.BlockSpec((1, NUM_CLASSES), lambda i: (0, 0)),
            ],
            out_specs=pl.BlockSpec((m_tile, NUM_CLASSES), lambda i: (i, 0)),
        ),
        compiler_params=pltpu.CompilerParams(
            dimension_semantics=("parallel",),     # batch axis -> both TCs on v7x
            vmem_limit_bytes=VMEM_LIMIT_BYTES,
        ),
        cost_estimate=pl.CostEstimate(
            flops=2 * batch * FEATURE_DIM * NUM_CLASSES,
            transcendentals=0,
            bytes_accessed=(batch * FEATURE_DIM * x_bytes
                            + FEATURE_DIM * NUM_CLASSES * w_bytes
                            + batch * NUM_CLASSES * 4),
        ),
    )(xf, wt, b)

    return out                                     # (B, 10), no host-side slicing


def init_fc8_params(key):
    """Deterministic init matching nn.Linear default: U(-1/sqrt(K), 1/sqrt(K))."""
    kw, kb = jax.random.split(key)
    bound = 1.0 / jnp.sqrt(jnp.float32(FEATURE_DIM))
    w8 = jax.random.uniform(
        kw, (NUM_CLASSES, FEATURE_DIM), jnp.float32, -bound, bound
    )
    b8 = jax.random.uniform(kb, (NUM_CLASSES,), jnp.float32, -bound, bound)
    return w8, b8


# TODO(synk): fc0..fc7 (3072x3072 Linears) are defined in the PyTorch __init__ but
# never applied in forward(), so they are deliberately not implemented here.


if __name__ == "__main__":
    key = jax.random.PRNGKey(0)
    k_x, k_p = jax.random.split(key)

    # Module-consistent input: batch=2, NCHW CIFAR image (3, 32, 32).
    x = jax.random.normal(k_x, (2, 3, 32, 32), jnp.float32)
    w8, b8 = init_fc8_params(k_p)

    # Pack the fc8 parameters ONCE (transpose + bias reshape), outside the hot path.
    wt, bp = pack_fc8_params(w8, b8)
    wt, bp = jax.block_until_ready((wt, bp))

    y = cifar10_poisoned_lr_forward(x, wt, bp)
    jax.block_until_ready(y)

    # Sanity check against plain-JAX reference of the same forward.
    y_ref = x.reshape(-1, FEATURE_DIM) @ w8.T + b8
    assert y.shape == (2, NUM_CLASSES)
    assert jnp.allclose(y, y_ref, atol=1e-4, rtol=1e-4)

    print("KERNEL_OK")
</pallas_src>

<mosaic_0001>
module attributes {stable_mosaic.version = 11 : i64} {
  func.func @_fc8_kernel(%arg0: i32, %arg1: memref<2x3072xf32, #tpu.memory_space<vmem>>, %arg2: memref<3072x10xf32, #tpu.memory_space<vmem>>, %arg3: memref<1x10xf32, #tpu.memory_space<vmem>>, %arg4: memref<2x10xf32, #tpu.memory_space<vmem>>) attributes {dimension_semantics = [#tpu.dimension_semantics<parallel>], iteration_bounds = array<i64: 1>, scalar_prefetch = 0 : i64, scratch_operands = 0 : i64, tpu.core_type = #tpu.core_type<tc>, window_params = [{transform_indices = @transform_0, window_bounds = array<i64: 2, 3072>}, {pipeline_mode = #tpu.pipeline_mode<synchronous>, transform_indices = @transform_1, window_bounds = array<i64: 3072, 10>}, {pipeline_mode = #tpu.pipeline_mode<synchronous>, transform_indices = @transform_2, window_bounds = array<i64: 1, 10>}, {transform_indices = @transform_3, window_bounds = array<i64: 2, 10>}]} {
    %c0 = arith.constant 0 : index
    %c0_0 = arith.constant 0 : index
    %0 = vector.load %arg1[%c0, %c0_0] : memref<2x3072xf32, #tpu.memory_space<vmem>>, vector<2x3072xf32>
    %c0_1 = arith.constant 0 : index
    %c0_2 = arith.constant 0 : index
    %1 = vector.load %arg2[%c0_1, %c0_2] : memref<3072x10xf32, #tpu.memory_space<vmem>>, vector<3072x10xf32>
    %cst = arith.constant dense<0.000000e+00> : vector<2x10xf32>
    %2 = tpu.matmul %0, %1, %cst {dimension_numbers = #tpu.dot_dimension_numbers<[1], [0], [0], [1], [0, 0, 1, 1], [], []>} : vector<2x3072xf32>, vector<3072x10xf32>, vector<2x10xf32> -> vector<2x10xf32>
    %c0_3 = arith.constant 0 : index
    %c0_4 = arith.constant 0 : index
    %3 = vector.load %arg3[%c0_3, %c0_4] : memref<1x10xf32, #tpu.memory_space<vmem>>, vector<1x10xf32>
    %4 = vector.broadcast %3 : vector<1x10xf32> to vector<2x10xf32>
    %5 = arith.addf %2, %4 : vector<2x10xf32>
    %c0_5 = arith.constant 0 : index
    %c0_6 = arith.constant 0 : index
    %6 = vector.load %arg4[%c0_5, %c0_6] : memref<2x10xf32, #tpu.memory_space<vmem>>, vector<2x10xf32>
    tpu.vector_store %arg4[%c0_5, %c0_6], %5 {strides = array<i32>} : memref<2x10xf32, #tpu.memory_space<vmem>>, vector<2x10xf32>,
    return
  }
  func.func @transform_0(%arg0: i32) -> (i32, i32) {
    %c0_i32 = arith.constant 0 : i32
    %c0_i32_0 = arith.constant 0 : i32
    return %arg0, %c0_i32 : i32, i32
  }
  func.func @transform_1(%arg0: i32) -> (i32, i32) {
    %c0_i32 = arith.constant 0 : i32
    %c0_i32_0 = arith.constant 0 : i32
    %c0_i32_1 = arith.constant 0 : i32
    return %c0_i32, %c0_i32_0 : i32, i32
  }
  func.func @transform_2(%arg0: i32) -> (i32, i32) {
    %c0_i32 = arith.constant 0 : i32
    %c0_i32_0 = arith.constant 0 : i32
    %c0_i32_1 = arith.constant 0 : i32
    return %c0_i32, %c0_i32_0 : i32, i32
  }
  func.func @transform_3(%arg0: i32) -> (i32, i32) {
    %c0_i32 = arith.constant 0 : i32
    %c0_i32_0 = arith.constant 0 : i32
    return %arg0, %c0_i32 : i32, i32
  }
}

</mosaic_0001>

<llo_original>
// kernel: cifar10_poisoned_lr_forward.1
$region0: #{cifar10_poisoned_lr_forward.1}
  #allocation0 [shape = 'u32[]', space=smem, size = 0x4, offset = 0x4, fixed_abs, tag = 'smem constant byte address 0x4 - core index']
  #allocation1 [shape = 'u32[72,128]{1,0:T(1,128)}', space=vmem, size = 0x9000, scoped, tag = 'internal scratch']
  %s0 = inlined_call_operand.vmem [shape: f32[2,3072], index: 0, kind: input, shape index: {}]
  %s1 = inlined_call_operand.vmem [shape: f32[3072,10], index: 1, kind: input, shape index: {}]
  %s2 = inlined_call_operand.vmem [shape: f32[1,10], index: 2, kind: input, shape index: {}]
  %s3 = inlined_call_operand.hbm [shape: f32[2,10], index: 3, kind: output, shape index: {}]
  %s4 = sld [smem:[#allocation0]]
  $region22: #{cifar10_poisoned_lr_forward.1} parent=0
    _
  %s6 = ssub.s32 1, %s4
  %s7 = scalar_select 0, %s6, %s4
  $region1: #{cifar10_poisoned_lr_forward.1} parent=0
    #allocation2 [shape = 'u8[1024]{0}', space=vmem, size = 0x400, scoped, tag = 'output window, operand 0, single buffered']
    #allocation3 [shape = 's32[1]{0}', space=sflag, size = 0x4, scoped, tag = 'scoped memory for cifar10_poisoned_lr_forward.1']
    %8 = vsyncpa [#allocation3], 0
    // Predicated region
    $region2: #{cifar10_poisoned_lr_forward.1} parent=1 // pred_check
      _
    $region3: #{cifar10_poisoned_lr_forward.1} parent=1 // pred_check_branch
      %10 = sbr.rel (0) target = $region5
    $region4: #{cifar10_poisoned_lr_forward.1} parent=1 // pred_region
      _
    $region5: #{cifar10_poisoned_lr_forward.1} parent=1 // pred_fallthru
      _
    // Predicated region
    $region6: #{cifar10_poisoned_lr_forward.1} parent=1 // pred_check
      _
    $region7: #{cifar10_poisoned_lr_forward.1} parent=1 // pred_check_branch
      %12 = sbr.rel (0) target = $region9
    $region8: #{cifar10_poisoned_lr_forward.1} parent=1 // pred_region
      _
    $region9: #{cifar10_poisoned_lr_forward.1} parent=1 // pred_fallthru
      _
    // Predicated region
    $region10: #{cifar10_poisoned_lr_forward.1} parent=1 // pred_check
      _
    $region11: #{cifar10_poisoned_lr_forward.1} parent=1 // pred_check_branch
      %14 = sbr.rel (0) target = $region13
    $region12: #{cifar10_poisoned_lr_forward.1} parent=1 // pred_region
      _
    $region13: #{cifar10_poisoned_lr_forward.1} parent=1 // pred_fallthru
      _
    %v15 = vld [vmem:[%s0] sm:$0xff]
    %v16 = vld [vmem:[%s0 + $0x8] sm:$0xff]
    %v17 = vld [vmem:[%s0 + $0x10] sm:$0xff]
    %v18 = vld [vmem:[%s0 + $0x18] sm:$0xff]
    %v19 = vld [vmem:[%s0 + $0x20] sm:$0xff]
    %v20 = vld [vmem:[%s0 + $0x28] sm:$0xff]
    %v21 = vld [vmem:[%s1] sm:$0xff]
    %v22 = vld [vmem:[%s1 + $0x8] sm:$0xff]
    %v23 = vld [vmem:[%s1 + $0x10] sm:$0xff]
    %v24 = vld [vmem:[%s1 + $0x18] sm:$0xff]
    %v25 = vld [vmem:[%s1 + $0x20] sm:$0xff]
    %v26 = vld [vmem:[%s1 + $0x28] sm:$0xff]
    %v27 = vld [vmem:[%s1 + $0x30] sm:$0xff]
    %v28 = vld [vmem:[%s1 + $0x38] sm:$0xff]
    %v29 = vld [vmem:[%s1 + $0x40] sm:$0xff]
    %v30 = vld [vmem:[%s1 + $0x48] sm:$0xff]
    %v31 = vld [vmem:[%s1 + $0x50] sm:$0xff]
    %v32 = vld [vmem:[%s1 + $0x58] sm:$0xff]
    %v33 = vld [vmem:[%s1 + $0x60] sm:$0xff]
    %v34 = vld [vmem:[%s1 + $0x68] sm:$0xff]
    %v35 = vld [vmem:[%s1 + $0x70] sm:$0xff]
    %v36 = vld [vmem:[%s1 + $0x78] sm:$0xff]
    %v37 = vld [vmem:[%s1 + $0x80] sm:$0xff]
    %v38 = vld [vmem:[%s1 + $0x88] sm:$0xff]
    %v39 = vld [vmem:[%s1 + $0x90] sm:$0xff]
    %v40 = vld [vmem:[%s1 + $0x98] sm:$0xff]
    %v41 = vld [vmem:[%s1 + $0xa0] sm:$0xff]
    %v42 = vld [vmem:[%s1 + $0xa8] sm:$0xff]
    %v43 = vld [vmem:[%s1 + $0xb0] sm:$0xff]
    %v44 = vld [vmem:[%s1 + $0xb8] sm:$0xff]
    %v45 = vld [vmem:[%s1 + $0xc0] sm:$0xff]
    %v46 = vld [vmem:[%s1 + $0xc8] sm:$0xff]
    %v47 = vld [vmem:[%s1 + $0xd0] sm:$0xff]
    %v48 = vld [vmem:[%s1 + $0xd8] sm:$0xff]
    %v49 = vld [vmem:[%s1 + $0xe0] sm:$0xff]
    %v50 = vld [vmem:[%s1 + $0xe8] sm:$0xff]
    %v51 = vld [vmem:[%s1 + $0xf0] sm:$0xff]
    %v52 = vld [vmem:[%s1 + $0xf8] sm:$0xff]
    %v53 = vld [vmem:[%s1 + $0x100] sm:$0xff]
    %v54 = vld [vmem:[%s1 + $0x108] sm:$0xff]
    %v55 = vld [vmem:[%s1 + $0x110] sm:$0xff]
    %v56 = vld [vmem:[%s1 + $0x118] sm:$0xff]
    %v57 = vld [vmem:[%s1 + $0x120] sm:$0xff]
    %v58 = vld [vmem:[%s1 + $0x128] sm:$0xff]
    %v59 = vld [vmem:[%s1 + $0x130] sm:$0xff]
    %v60 = vld [vmem:[%s1 + $0x138] sm:$0xff]
    %v61 = vld [vmem:[%s1 + $0x140] sm:$0xff]
    %v62 = vld [vmem:[%s1 + $0x148] sm:$0xff]
    %v63 = vld [vmem:[%s1 + $0x150] sm:$0xff]
    %v64 = vld [vmem:[%s1 + $0x158] sm:$0xff]
    %v65 = vld [vmem:[%s1 + $0x160] sm:$0xff]
    %v66 = vld [vmem:[%s1 + $0x168] sm:$0xff]
    %v67 = vld [vmem:[%s1 + $0x170] sm:$0xff]
    %v68 = vld [vmem:[%s1 + $0x178] sm:$0xff]
    %v69 = vld [vmem:[%s1 + $0x180] sm:$0xff]
    %v70 = vld [vmem:[%s1 + $0x188] sm:$0xff]
    %v71 = vld [vmem:[%s1 + $0x190] sm:$0xff]
    %v72 = vld [vmem:[%s1 + $0x198] sm:$0xff]
    %v73 = vld [vmem:[%s1 + $0x1a0] sm:$0xff]
    %v74 = vld [vmem:[%s1 + $0x1a8] sm:$0xff]
    %v75 = vld [vmem:[%s1 + $0x1b0] sm:$0xff]
    %v76 = vld [vmem:[%s1 + $0x1b8] sm:$0xff]
    %v77 = vld [vmem:[%s1 + $0x1c0] sm:$0xff]
    %v78 = vld [vmem:[%s1 + $0x1c8] sm:$0xff]
    %v79 = vld [vmem:[%s1 + $0x1d0] sm:$0xff]
    %v80 = vld [vmem:[%s1 + $0x1d8] sm:$0xff]
    %v81 = vld [vmem:[%s1 + $0x1e0] sm:$0xff]
    %v82 = vld [vmem:[%s1 + $0x1e8] sm:$0xff]
    %v83 = vld [vmem:[%s1 + $0x1f0] sm:$0xff]
    %v84 = vld [vmem:[%s1 + $0x1f8] sm:$0xff]
    %v85 = vld [vmem:[%s1 + $0x200] sm:$0xff]
    %v86 = vld [vmem:[%s1 + $0x208] sm:$0xff]
    %v87 = vld [vmem:[%s1 + $0x210] sm:$0xff]
    %v88 = vld [vmem:[%s1 + $0x218] sm:$0xff]
    %v89 = vld [vmem:[%s1 + $0x220] sm:$0xff]
    %v90 = vld [vmem:[%s1 + $0x228] sm:$0xff]
    %v91 = vld [vmem:[%s1 + $0x230] sm:$0xff]
    %v92 = vld [vmem:[%s1 + $0x238] sm:$0xff]
    %v93 = vld [vmem:[%s1 + $0x240] sm:$0xff]
    %v94 = vld [vmem:[%s1 + $0x248] sm:$0xff]
    %v95 = vld [vmem:[%s1 + $0x250] sm:$0xff]
    %v96 = vld [vmem:[%s1 + $0x258] sm:$0xff]
    %v97 = vld [vmem:[%s1 + $0x260] sm:$0xff]
    %v98 = vld [vmem:[%s1 + $0x268] sm:$0xff]
    %v99 = vld [vmem:[%s1 + $0x270] sm:$0xff]
    %v100 = vld [vmem:[%s1 + $0x278] sm:$0xff]
    %v101 = vld [vmem:[%s1 + $0x280] sm:$0xff]
    %v102 = vld [vmem:[%s1 + $0x288] sm:$0xff]
    %v103 = vld [vmem:[%s1 + $0x290] sm:$0xff]
    %v104 = vld [vmem:[%s1 + $0x298] sm:$0xff]
    %v105 = vld [vmem:[%s1 + $0x2a0] sm:$0xff]
    %v106 = vld [vmem:[%s1 + $0x2a8] sm:$0xff]
    %v107 = vld [vmem:[%s1 + $0x2b0] sm:$0xff]
    %v108 = vld [vmem:[%s1 + $0x2b8] sm:$0xff]
    %v109 = vld [vmem:[%s1 + $0x2c0] sm:$0xff]
    %v110 = vld [vmem:[%s1 + $0x2c8] sm:$0xff]
    %v111 = vld [vmem:[%s1 + $0x2d0] sm:$0xff]
    %v112 = vld [vmem:[%s1 + $0x2d8] sm:$0xff]
    %v113 = vld [vmem:[%s1 + $0x2e0] sm:$0xff]
    %v114 = vld [vmem:[%s1 + $0x2e8] sm:$0xff]
    %v115 = vld [vmem:[%s1 + $0x2f0] sm:$0xff]
    %v116 = vld [vmem:[%s1 + $0x2f8] sm:$0xff]
    %v117 = vld [vmem:[%s1 + $0x300] sm:$0xff]
    %v118 = vld [vmem:[%s1 + $0x308] sm:$0xff]
    %v119 = vld [vmem:[%s1 + $0x310] sm:$0xff]
    %v120 = vld [vmem:[%s1 + $0x318] sm:$0xff]
    %v121 = vld [vmem:[%s1 + $0x320] sm:$0xff]
    %v122 = vld [vmem:[%s1 + $0x328] sm:$0xff]
    %v123 = vld [vmem:[%s1 + $0x330] sm:$0xff]
    %v124 = vld [vmem:[%s1 + $0x338] sm:$0xff]
    %v125 = vld [vmem:[%s1 + $0x340] sm:$0xff]
    %v126 = vld [vmem:[%s1 + $0x348] sm:$0xff]
    %v127 = vld [vmem:[%s1 + $0x350] sm:$0xff]
    %v128 = vld [vmem:[%s1 + $0x358] sm:$0xff]
    %v129 = vld [vmem:[%s1 + $0x360] sm:$0xff]
    %v130 = vld [vmem:[%s1 + $0x368] sm:$0xff]
    %v131 = vld [vmem:[%s1 + $0x370] sm:$0xff]
    %v132 = vld [vmem:[%s1 + $0x378] sm:$0xff]
    %v133 = vld [vmem:[%s1 + $0x380] sm:$0xff]
    %v134 = vld [vmem:[%s1 + $0x388] sm:$0xff]
    %v135 = vld [vmem:[%s1 + $0x390] sm:$0xff]
    %v136 = vld [vmem:[%s1 + $0x398] sm:$0xff]
    %v137 = vld [vmem:[%s1 + $0x3a0] sm:$0xff]
    %v138 = vld [vmem:[%s1 + $0x3a8] sm:$0xff]
    %v139 = vld [vmem:[%s1 + $0x3b0] sm:$0xff]
    %v140 = vld [vmem:[%s1 + $0x3b8] sm:$0xff]
    %v141 = vld [vmem:[%s1 + $0x3c0] sm:$0xff]
    %v142 = vld [vmem:[%s1 + $0x3c8] sm:$0xff]
    %v143 = vld [vmem:[%s1 + $0x3d0] sm:$0xff]
    %v144 = vld [vmem:[%s1 + $0x3d8] sm:$0xff]
    %v145 = vld [vmem:[%s1 + $0x3e0] sm:$0xff]
    %v146 = vld [vmem:[%s1 + $0x3e8] sm:$0xff]
    %v147 = vld [vmem:[%s1 + $0x3f0] sm:$0xff]
    %v148 = vld [vmem:[%s1 + $0x3f8] sm:$0xff]
    %v149 = vld [vmem:[%s1 + $0x400] sm:$0xff]
    %v150 = vld [vmem:[%s1 + $0x408] sm:$0xff]
    %v151 = vld [vmem:[%s1 + $0x410] sm:$0xff]
    %v152 = vld [vmem:[%s1 + $0x418] sm:$0xff]
    %v153 = vld [vmem:[%s1 + $0x420] sm:$0xff]
    %v154 = vld [vmem:[%s1 + $0x428] sm:$0xff]
    %v155 = vld [vmem:[%s1 + $0x430] sm:$0xff]
    %v156 = vld [vmem:[%s1 + $0x438] sm:$0xff]
    %v157 = vld [vmem:[%s1 + $0x440] sm:$0xff]
    %v158 = vld [vmem:[%s1 + $0x448] sm:$0xff]
    %v159 = vld [vmem:[%s1 + $0x450] sm:$0xff]
    %v160 = vld [vmem:[%s1 + $0x458] sm:$0xff]
    %v161 = vld [vmem:[%s1 + $0x460] sm:$0xff]
    %v162 = vld [vmem:[%s1 + $0x468] sm:$0xff]
    %v163 = vld [vmem:[%s1 + $0x470] sm:$0xff]
    %v164 = vld [vmem:[%s1 + $0x478] sm:$0xff]
    %v165 = vld [vmem:[%s1 + $0x480] sm:$0xff]
    %v166 = vld [vmem:[%s1 + $0x488] sm:$0xff]
    %v167 = vld [vmem:[%s1 + $0x490] sm:$0xff]
    %v168 = vld [vmem:[%s1 + $0x498] sm:$0xff]
    %v169 = vld [vmem:[%s1 + $0x4a0] sm:$0xff]
    %v170 = vld [vmem:[%s1 + $0x4a8] sm:$0xff]
    %v171 = vld [vmem:[%s1 + $0x4b0] sm:$0xff]
    %v172 = vld [vmem:[%s1 + $0x4b8] sm:$0xff]
    %v173 = vld [vmem:[%s1 + $0x4c0] sm:$0xff]
    %v174 = vld [vmem:[%s1 + $0x4c8] sm:$0xff]
    %v175 = vld [vmem:[%s1 + $0x4d0] sm:$0xff]
    %v176 = vld [vmem:[%s1 + $0x4d8] sm:$0xff]
    %v177 = vld [vmem:[%s1 + $0x4e0] sm:$0xff]
    %v178 = vld [vmem:[%s1 + $0x4e8] sm:$0xff]
    %v179 = vld [vmem:[%s1 + $0x4f0] sm:$0xff]
    %v180 = vld [vmem:[%s1 + $0x4f8] sm:$0xff]
    %v181 = vld [vmem:[%s1 + $0x500] sm:$0xff]
    %v182 = vld [vmem:[%s1 + $0x508] sm:$0xff]
    %v183 = vld [vmem:[%s1 + $0x510] sm:$0xff]
    %v184 = vld [vmem:[%s1 + $0x518] sm:$0xff]
    %v185 = vld [vmem:[%s1 + $0x520] sm:$0xff]
    %v186 = vld [vmem:[%s1 + $0x528] sm:$0xff]
    %v187 = vld [vmem:[%s1 + $0x530] sm:$0xff]
    %v188 = vld [vmem:[%s1 + $0x538] sm:$0xff]
    %v189 = vld [vmem:[%s1 + $0x540] sm:$0xff]
    %v190 = vld [vmem:[%s1 + $0x548] sm:$0xff]
    %v191 = vld [vmem:[%s1 + $0x550] sm:$0xff]
    %v192 = vld [vmem:[%s1 + $0x558] sm:$0xff]
    %v193 = vld [vmem:[%s1 + $0x560] sm:$0xff]
    %v194 = vld [vmem:[%s1 + $0x568] sm:$0xff]
    %v195 = vld [vmem:[%s1 + $0x570] sm:$0xff]
    %v196 = vld [vmem:[%s1 + $0x578] sm:$0xff]
    %v197 = vld [vmem:[%s1 + $0x580] sm:$0xff]
    %v198 = vld [vmem:[%s1 + $0x588] sm:$0xff]
    %v199 = vld [vmem:[%s1 + $0x590] sm:$0xff]
    %v200 = vld [vmem:[%s1 + $0x598] sm:$0xff]
    %v201 = vld [vmem:[%s1 + $0x5a0] sm:$0xff]
    %v202 = vld [vmem:[%s1 + $0x5a8] sm:$0xff]
    %v203 = vld [vmem:[%s1 + $0x5b0] sm:$0xff]
    %v204 = vld [vmem:[%s1 + $0x5b8] sm:$0xff]
    %v205 = vld [vmem:[%s1 + $0x5c0] sm:$0xff]
    %v206 = vld [vmem:[%s1 + $0x5c8] sm:$0xff]
    %v207 = vld [vmem:[%s1 + $0x5d0] sm:$0xff]
    %v208 = vld [vmem:[%s1 + $0x5d8] sm:$0xff]
    %v209 = vld [vmem:[%s1 + $0x5e0] sm:$0xff]
    %v210 = vld [vmem:[%s1 + $0x5e8] sm:$0xff]
    %v211 = vld [vmem:[%s1 + $0x5f0] sm:$0xff]
    %v212 = vld [vmem:[%s1 + $0x5f8] sm:$0xff]
    %v213 = vld [vmem:[%s1 + $0x600] sm:$0xff]
    %v214 = vld [vmem:[%s1 + $0x608] sm:$0xff]
    %v215 = vld [vmem:[%s1 + $0x610] sm:$0xff]
    %v216 = vld [vmem:[%s1 + $0x618] sm:$0xff]
    %v217 = vld [vmem:[%s1 + $0x620] sm:$0xff]
    %v218 = vld [vmem:[%s1 + $0x628] sm:$0xff]
    %v219 = vld [vmem:[%s1 + $0x630] sm:$0xff]
    %v220 = vld [vmem:[%s1 + $0x638] sm:$0xff]
    %v221 = vld [vmem:[%s1 + $0x640] sm:$0xff]
    %v222 = vld [vmem:[%s1 + $0x648] sm:$0xff]
    %v223 = vld [vmem:[%s1 + $0x650] sm:$0xff]
    %v224 = vld [vmem:[%s1 + $0x658] sm:$0xff]
    %v225 = vld [vmem:[%s1 + $0x660] sm:$0xff]
    %v226 = vld [vmem:[%s1 + $0x668] sm:$0xff]
    %v227 = vld [vmem:[%s1 + $0x670] sm:$0xff]
    %v228 = vld [vmem:[%s1 + $0x678] sm:$0xff]
    %v229 = vld [vmem:[%s1 + $0x680] sm:$0xff]
    %v230 = vld [vmem:[%s1 + $0x688] sm:$0xff]
    %v231 = vld [vmem:[%s1 + $0x690] sm:$0xff]
    %v232 = vld [vmem:[%s1 + $0x698] sm:$0xff]
    %v233 = vld [vmem:[%s1 + $0x6a0] sm:$0xff]
    %v234 = vld [vmem:[%s1 + $0x6a8] sm:$0xff]
    %v235 = vld [vmem:[%s1 + $0x6b0] sm:$0xff]
    %v236 = vld [vmem:[%s1 + $0x6b8] sm:$0xff]
    %v237 = vld [vmem:[%s1 + $0x6c0] sm:$0xff]
    %v238 = vld [vmem:[%s1 + $0x6c8] sm:$0xff]
    %v239 = vld [vmem:[%s1 + $0x6d0] sm:$0xff]
    %v240 = vld [vmem:[%s1 + $0x6d8] sm:$0xff]
    %v241 = vld [vmem:[%s1 + $0x6e0] sm:$0xff]
    %v242 = vld [vmem:[%s1 + $0x6e8] sm:$0xff]
    %v243 = vld [vmem:[%s1 + $0x6f0] sm:$0xff]
    %v244 = vld [vmem:[%s1 + $0x6f8] sm:$0xff]
    %v245 = vld [vmem:[%s1 + $0x700] sm:$0xff]
    %v246 = vld [vmem:[%s1 + $0x708] sm:$0xff]
    %v247 = vld [vmem:[%s1 + $0x710] sm:$0xff]
    %v248 = vld [vmem:[%s1 + $0x718] sm:$0xff]
    %v249 = vld [vmem:[%s1 + $0x720] sm:$0xff]
    %v250 = vld [vmem:[%s1 + $0x728] sm:$0xff]
    %v251 = vld [vmem:[%s1 + $0x730] sm:$0xff]
    %v252 = vld [vmem:[%s1 + $0x738] sm:$0xff]
    %v253 = vld [vmem:[%s1 + $0x740] sm:$0xff]
    %v254 = vld [vmem:[%s1 + $0x748] sm:$0xff]
    %v255 = vld [vmem:[%s1 + $0x750] sm:$0xff]
    %v256 = vld [vmem:[%s1 + $0x758] sm:$0xff]
    %v257 = vld [vmem:[%s1 + $0x760] sm:$0xff]
    %v258 = vld [vmem:[%s1 + $0x768] sm:$0xff]
    %v259 = vld [vmem:[%s1 + $0x770] sm:$0xff]
    %v260 = vld [vmem:[%s1 + $0x778] sm:$0xff]
    %v261 = vld [vmem:[%s1 + $0x780] sm:$0xff]
    %v262 = vld [vmem:[%s1 + $0x788] sm:$0xff]
    %v263 = vld [vmem:[%s1 + $0x790] sm:$0xff]
    %v264 = vld [vmem:[%s1 + $0x798] sm:$0xff]
    %v265 = vld [vmem:[%s1 + $0x7a0] sm:$0xff]
    %v266 = vld [vmem:[%s1 + $0x7a8] sm:$0xff]
    %v267 = vld [vmem:[%s1 + $0x7b0] sm:$0xff]
    %v268 = vld [vmem:[%s1 + $0x7b8] sm:$0xff]
    %v269 = vld [vmem:[%s1 + $0x7c0] sm:$0xff]
    %v270 = vld [vmem:[%s1 + $0x7c8] sm:$0xff]
    %v271 = vld [vmem:[%s1 + $0x7d0] sm:$0xff]
    %v272 = vld [vmem:[%s1 + $0x7d8] sm:$0xff]
    %v273 = vld [vmem:[%s1 + $0x7e0] sm:$0xff]
    %v274 = vld [vmem:[%s1 + $0x7e8] sm:$0xff]
    %v275 = vld [vmem:[%s1 + $0x7f0] sm:$0xff]
    %v276 = vld [vmem:[%s1 + $0x7f8] sm:$0xff]
    %v277 = vld [vmem:[%s1 + $0x800] sm:$0xff]
    %v278 = vld [vmem:[%s1 + $0x808] sm:$0xff]
    %v279 = vld [vmem:[%s1 + $0x810] sm:$0xff]
    %v280 = vld [vmem:[%s1 + $0x818] sm:$0xff]
    %v281 = vld [vmem:[%s1 + $0x820] sm:$0xff]
    %v282 = vld [vmem:[%s1 + $0x828] sm:$0xff]
    %v283 = vld [vmem:[%s1 + $0x830] sm:$0xff]
    %v284 = vld [vmem:[%s1 + $0x838] sm:$0xff]
    %v285 = vld [vmem:[%s1 + $0x840] sm:$0xff]
    %v286 = vld [vmem:[%s1 + $0x848] sm:$0xff]
    %v287 = vld [vmem:[%s1 + $0x850] sm:$0xff]
    %v288 = vld [vmem:[%s1 + $0x858] sm:$0xff]
    %v289 = vld [vmem:[%s1 + $0x860] sm:$0xff]
    %v290 = vld [vmem:[%s1 + $0x868] sm:$0xff]
    %v291 = vld [vmem:[%s1 + $0x870] sm:$0xff]
    %v292 = vld [vmem:[%s1 + $0x878] sm:$0xff]
    %v293 = vld [vmem:[%s1 + $0x880] sm:$0xff]
    %v294 = vld [vmem:[%s1 + $0x888] sm:$0xff]
    %v295 = vld [vmem:[%s1 + $0x890] sm:$0xff]
    %v296 = vld [vmem:[%s1 + $0x898] sm:$0xff]
    %v297 = vld [vmem:[%s1 + $0x8a0] sm:$0xff]
    %v298 = vld [vmem:[%s1 + $0x8a8] sm:$0xff]
    %v299 = vld [vmem:[%s1 + $0x8b0] sm:$0xff]
    %v300 = vld [vmem:[%s1 + $0x8b8] sm:$0xff]
    %v301 = vld [vmem:[%s1 + $0x8c0] sm:$0xff]
    %v302 = vld [vmem:[%s1 + $0x8c8] sm:$0xff]
    %v303 = vld [vmem:[%s1 + $0x8d0] sm:$0xff]
    %v304 = vld [vmem:[%s1 + $0x8d8] sm:$0xff]
    %v305 = vld [vmem:[%s1 + $0x8e0] sm:$0xff]
    %v306 = vld [vmem:[%s1 + $0x8e8] sm:$0xff]
    %v307 = vld [vmem:[%s1 + $0x8f0] sm:$0xff]
    %v308 = vld [vmem:[%s1 + $0x8f8] sm:$0xff]
    %v309 = vld [vmem:[%s1 + $0x900] sm:$0xff]
    %v310 = vld [vmem:[%s1 + $0x908] sm:$0xff]
    %v311 = vld [vmem:[%s1 + $0x910] sm:$0xff]
    %v312 = vld [vmem:[%s1 + $0x918] sm:$0xff]
    %v313 = vld [vmem:[%s1 + $0x920] sm:$0xff]
    %v314 = vld [vmem:[%s1 + $0x928] sm:$0xff]
    %v315 = vld [vmem:[%s1 + $0x930] sm:$0xff]
    %v316 = vld [vmem:[%s1 + $0x938] sm:$0xff]
    %v317 = vld [vmem:[%s1 + $0x940] sm:$0xff]
    %v318 = vld [vmem:[%s1 + $0x948] sm:$0xff]
    %v319 = vld [vmem:[%s1 + $0x950] sm:$0xff]
    %v320 = vld [vmem:[%s1 + $0x958] sm:$0xff]
    %v321 = vld [vmem:[%s1 + $0x960] sm:$0xff]
    %v322 = vld [vmem:[%s1 + $0x968] sm:$0xff]
    %v323 = vld [vmem:[%s1 + $0x970] sm:$0xff]
    %v324 = vld [vmem:[%s1 + $0x978] sm:$0xff]
    %v325 = vld [vmem:[%s1 + $0x980] sm:$0xff]
    %v326 = vld [vmem:[%s1 + $0x988] sm:$0xff]
    %v327 = vld [vmem:[%s1 + $0x990] sm:$0xff]
    %v328 = vld [vmem:[%s1 + $0x998] sm:$0xff]
    %v329 = vld [vmem:[%s1 + $0x9a0] sm:$0xff]
    %v330 = vld [vmem:[%s1 + $0x9a8] sm:$0xff]
    %v331 = vld [vmem:[%s1 + $0x9b0] sm:$0xff]
    %v332 = vld [vmem:[%s1 + $0x9b8] sm:$0xff]
    %v333 = vld [vmem:[%s1 + $0x9c0] sm:$0xff]
    %v334 = vld [vmem:[%s1 + $0x9c8] sm:$0xff]
    %v335 = vld [vmem:[%s1 + $0x9d0] sm:$0xff]
    %v336 = vld [vmem:[%s1 + $0x9d8] sm:$0xff]
    %v337 = vld [vmem:[%s1 + $0x9e0] sm:$0xff]
    %v338 = vld [vmem:[%s1 + $0x9e8] sm:$0xff]
    %v339 = vld [vmem:[%s1 + $0x9f0] sm:$0xff]
    %v340 = vld [vmem:[%s1 + $0x9f8] sm:$0xff]
    %v341 = vld [vmem:[%s1 + $0xa00] sm:$0xff]
    %v342 = vld [vmem:[%s1 + $0xa08] sm:$0xff]
    %v343 = vld [vmem:[%s1 + $0xa10] sm:$0xff]
    %v344 = vld [vmem:[%s1 + $0xa18] sm:$0xff]
    %v345 = vld [vmem:[%s1 + $0xa20] sm:$0xff]
    %v346 = vld [vmem:[%s1 + $0xa28] sm:$0xff]
    %v347 = vld [vmem:[%s1 + $0xa30] sm:$0xff]
    %v348 = vld [vmem:[%s1 + $0xa38] sm:$0xff]
    %v349 = vld [vmem:[%s1 + $0xa40] sm:$0xff]
    %v350 = vld [vmem:[%s1 + $0xa48] sm:$0xff]
    %v351 = vld [vmem:[%s1 + $0xa50] sm:$0xff]
    %v352 = vld [vmem:[%s1 + $0xa58] sm:$0xff]
    %v353 = vld [vmem:[%s1 + $0xa60] sm:$0xff]
    %v354 = vld [vmem:[%s1 + $0xa68] sm:$0xff]
    %v355 = vld [vmem:[%s1 + $0xa70] sm:$0xff]
    %v356 = vld [vmem:[%s1 + $0xa78] sm:$0xff]
    %v357 = vld [vmem:[%s1 + $0xa80] sm:$0xff]
    %v358 = vld [vmem:[%s1 + $0xa88] sm:$0xff]
    %v359 = vld [vmem:[%s1 + $0xa90] sm:$0xff]
    %v360 = vld [vmem:[%s1 + $0xa98] sm:$0xff]
    %v361 = vld [vmem:[%s1 + $0xaa0] sm:$0xff]
    %v362 = vld [vmem:[%s1 + $0xaa8] sm:$0xff]
    %v363 = vld [vmem:[%s1 + $0xab0] sm:$0xff]
    %v364 = vld [vmem:[%s1 + $0xab8] sm:$0xff]
    %v365 = vld [vmem:[%s1 + $0xac0] sm:$0xff]
    %v366 = vld [vmem:[%s1 + $0xac8] sm:$0xff]
    %v367 = vld [vmem:[%s1 + $0xad0] sm:$0xff]
    %v368 = vld [vmem:[%s1 + $0xad8] sm:$0xff]
    %v369 = vld [vmem:[%s1 + $0xae0] sm:$0xff]
    %v370 = vld [vmem:[%s1 + $0xae8] sm:$0xff]
    %v371 = vld [vmem:[%s1 + $0xaf0] sm:$0xff]
    %v372 = vld [vmem:[%s1 + $0xaf8] sm:$0xff]
    %v373 = vld [vmem:[%s1 + $0xb00] sm:$0xff]
    %v374 = vld [vmem:[%s1 + $0xb08] sm:$0xff]
    %v375 = vld [vmem:[%s1 + $0xb10] sm:$0xff]
    %v376 = vld [vmem:[%s1 + $0xb18] sm:$0xff]
    %v377 = vld [vmem:[%s1 + $0xb20] sm:$0xff]
    %v378 = vld [vmem:[%s1 + $0xb28] sm:$0xff]
    %v379 = vld [vmem:[%s1 + $0xb30] sm:$0xff]
    %v380 = vld [vmem:[%s1 + $0xb38] sm:$0xff]
    %v381 = vld [vmem:[%s1 + $0xb40] sm:$0xff]
    %v382 = vld [vmem:[%s1 + $0xb48] sm:$0xff]
    %v383 = vld [vmem:[%s1 + $0xb50] sm:$0xff]
    %v384 = vld [vmem:[%s1 + $0xb58] sm:$0xff]
    %v385 = vld [vmem:[%s1 + $0xb60] sm:$0xff]
    %v386 = vld [vmem:[%s1 + $0xb68] sm:$0xff]
    %v387 = vld [vmem:[%s1 + $0xb70] sm:$0xff]
    %v388 = vld [vmem:[%s1 + $0xb78] sm:$0xff]
    %v389 = vld [vmem:[%s1 + $0xb80] sm:$0xff]
    %v390 = vld [vmem:[%s1 + $0xb88] sm:$0xff]
    %v391 = vld [vmem:[%s1 + $0xb90] sm:$0xff]
    %v392 = vld [vmem:[%s1 + $0xb98] sm:$0xff]
    %v393 = vld [vmem:[%s1 + $0xba0] sm:$0xff]
    %v394 = vld [vmem:[%s1 + $0xba8] sm:$0xff]
    %v395 = vld [vmem:[%s1 + $0xbb0] sm:$0xff]
    %v396 = vld [vmem:[%s1 + $0xbb8] sm:$0xff]
    %v397 = vld [vmem:[%s1 + $0xbc0] sm:$0xff]
    %v398 = vld [vmem:[%s1 + $0xbc8] sm:$0xff]
    %v399 = vld [vmem:[%s1 + $0xbd0] sm:$0xff]
    %v400 = vld [vmem:[%s1 + $0xbd8] sm:$0xff]
    %v401 = vld [vmem:[%s1 + $0xbe0] sm:$0xff]
    %v402 = vld [vmem:[%s1 + $0xbe8] sm:$0xff]
    %v403 = vld [vmem:[%s1 + $0xbf0] sm:$0xff]
    %v404 = vld [vmem:[%s1 + $0xbf8] sm:$0xff]
    %v405 = vld [vmem:[%s2] sm:$0x1]
    %v407 = vperm.slane %v405, 0
    %415 = vst [vmem:[#allocation1] ss:$4 sm:$0xff] %v15
    %s416 = scalar_lea.vmem [#allocation1], 32
    %417 = vst [vmem:[%s416] ss:$4 sm:$0xff] %v16
    %v418 = vld.sshfl [vmem:[#allocation1] sm:$0xff pattern:$0x73625140]
    %v419 = vld.sshfl [vmem:[#allocation1 + $0x8] sm:$0xff pattern:$0x73625140]
    %v420 = vld.sshfl [vmem:[#allocation1 + $0x10] sm:$0xff pattern:$0x73625140]
    %v421 = vld.sshfl [vmem:[#allocation1 + $0x18] sm:$0xff pattern:$0x73625140]
    %v422 = vld.sshfl [vmem:[#allocation1 + $0x20] sm:$0xff pattern:$0x73625140]
    %v423 = vld.sshfl [vmem:[#allocation1 + $0x28] sm:$0xff pattern:$0x73625140]
    %v424 = vld.sshfl [vmem:[#allocation1 + $0x30] sm:$0xff pattern:$0x73625140]
    %v425 = vld.sshfl [vmem:[#allocation1 + $0x38] sm:$0xff pattern:$0x73625140]
    %426 = vst [vmem:[#allocation1] ss:$4 sm:$0xff] %v17
    %427 = vst [vmem:[%s416] ss:$4 sm:$0xff] %v18
    %v428 = vld.sshfl [vmem:[#allocation1] sm:$0xff pattern:$0x73625140]
    %v429 = vld.sshfl [vmem:[#allocation1 + $0x8] sm:$0xff pattern:$0x73625140]
    %v430 = vld.sshfl [vmem:[#allocation1 + $0x10] sm:$0xff pattern:$0x73625140]
    %v431 = vld.sshfl [vmem:[#allocation1 + $0x18] sm:$0xff pattern:$0x73625140]
    %v432 = vld.sshfl [vmem:[#allocation1 + $0x20] sm:$0xff pattern:$0x73625140]
    %v433 = vld.sshfl [vmem:[#allocation1 + $0x28] sm:$0xff pattern:$0x73625140]
    %v434 = vld.sshfl [vmem:[#allocation1 + $0x30] sm:$0xff pattern:$0x73625140]
    %v435 = vld.sshfl [vmem:[#allocation1 + $0x38] sm:$0xff pattern:$0x73625140]
    %436 = vst [vmem:[#allocation1] ss:$4 sm:$0xff] %v19
    %437 = vst [vmem:[%s416] ss:$4 sm:$0xff] %v20
    %v438 = vld.sshfl [vmem:[#allocation1] sm:$0xff pattern:$0x73625140]
    %v439 = vld.sshfl [vmem:[#allocation1 + $0x8] sm:$0xff pattern:$0x73625140]
    %v440 = vld.sshfl [vmem:[#allocation1 + $0x10] sm:$0xff pattern:$0x73625140]
    %v441 = vld.sshfl [vmem:[#allocation1 + $0x18] sm:$0xff pattern:$0x73625140]
    %v442 = vld.sshfl [vmem:[#allocation1 + $0x20] sm:$0xff pattern:$0x73625140]
    %v443 = vld.sshfl [vmem:[#allocation1 + $0x28] sm:$0xff pattern:$0x73625140]
    %v444 = vld.sshfl [vmem:[#allocation1 + $0x30] sm:$0xff pattern:$0x73625140]
    %v445 = vld.sshfl [vmem:[#allocation1 + $0x38] sm:$0xff pattern:$0x73625140]
    %470 = vmatpush.msra.mxu0 %v36
    %471 = vmatpush.msra.mxu0 %v35
    %472 = vmatpush.msra.mxu0 %v34
    %473 = vmatpush.msra.mxu0 %v33
    %474 = vmatpush.msra.mxu0 %v32
    %475 = vmatpush.msra.mxu0 %v31
    %476 = vmatpush.msra.mxu0 %v30
    %477 = vmatpush.msra.mxu0 %v29
    %478 = vmatpush.msra.mxu0 %v28
    %479 = vmatpush.msra.mxu0 %v27
    %480 = vmatpush.msra.mxu0 %v26
    %481 = vmatpush.msra.mxu0 %v25
    %482 = vmatpush.msra.mxu0 %v24
    %483 = vmatpush.msra.mxu0 %v23
    %484 = vmatpush.msra.mxu0 %v22
    %485 = vmatpush.msra.mxu0 %v21
    %486 = vmatmul.f32.gmra.mxu0 %v418
    %v487 = vpop.f32.mrf.mxu0
    %v488 = vadd.f32 %v407, %v487
    %489 = vdwg.mxu0
    %490 = vmatpush.msra.mxu0 %v52
    %491 = vmatpush.msra.mxu0 %v51
    %492 = vmatpush.msra.mxu0 %v50
    %493 = vmatpush.msra.mxu0 %v49
    %494 = vmatpush.msra.mxu0 %v48
    %495 = vmatpush.msra.mxu0 %v47
    %496 = vmatpush.msra.mxu0 %v46
    %497 = vmatpush.msra.mxu0 %v45
    %498 = vmatpush.msra.mxu0 %v44
    %499 = vmatpush.msra.mxu0 %v43
    %500 = vmatpush.msra.mxu0 %v42
    %501 = vmatpush.msra.mxu0 %v41
    %502 = vmatpush.msra.mxu0 %v40
    %503 = vmatpush.msra.mxu0 %v39
    %504 = vmatpush.msra.mxu0 %v38
    %505 = vmatpush.msra.mxu0 %v37
    %506 = vmatmul.f32.gmra.mxu0 %v419
    %v507 = vpop.f32.mrf.mxu0
    %v508 = vadd.f32 %v488, %v507
    %509 = vdwg.mxu0
    %510 = vmatpush.msra.mxu0 %v68
    %511 = vmatpush.msra.mxu0 %v67
    %512 = vmatpush.msra.mxu0 %v66
    %513 = vmatpush.msra.mxu0 %v65
    %514 = vmatpush.msra.mxu0 %v64
    %515 = vmatpush.msra.mxu0 %v63
    %516 = vmatpush.msra.mxu0 %v62
    %517 = vmatpush.msra.mxu0 %v61
    %518 = vmatpush.msra.mxu0 %v60
    %519 = vmatpush.msra.mxu0 %v59
    %520 = vmatpush.msra.mxu0 %v58
    %521 = vmatpush.msra.mxu0 %v57
    %522 = vmatpush.msra.mxu0 %v56
    %523 = vmatpush.msra.mxu0 %v55
    %524 = vmatpush.msra.mxu0 %v54
    %525 = vmatpush.msra.mxu0 %v53
    %526 = vmatmul.f32.gmra.mxu0 %v420
    %v527 = vpop.f32.mrf.mxu0
    %v528 = vadd.f32 %v508, %v527
    %529 = vdwg.mxu0
    %530 = vmatpush.msra.mxu0 %v84
    %531 = vmatpush.msra.mxu0 %v83
    %532 = vmatpush.msra.mxu0 %v82
    %533 = vmatpush.msra.mxu0 %v81
    %534 = vmatpush.msra.mxu0 %v80
    %535 = vmatpush.msra.mxu0 %v79
    %536 = vmatpush.msra.mxu0 %v78
    %537 = vmatpush.msra.mxu0 %v77
    %538 = vmatpush.msra.mxu0 %v76
    %539 = vmatpush.msra.mxu0 %v75
    %540 = vmatpush.msra.mxu0 %v74
    %541 = vmatpush.msra.mxu0 %v73
    %542 = vmatpush.msra.mxu0 %v72
    %543 = vmatpush.msra.mxu0 %v71
    %544 = vmatpush.msra.mxu0 %v70
    %545 = vmatpush.msra.mxu0 %v69
    %546 = vmatmul.f32.gmra.mxu0 %v421
    %v547 = vpop.f32.mrf.mxu0
    %v548 = vadd.f32 %v528, %v547
    %549 = vdwg.mxu0
    %550 = vmatpush.msra.mxu0 %v100
    %551 = vmatpush.msra.mxu0 %v99
    %552 = vmatpush.msra.mxu0 %v98
    %553 = vmatpush.msra.mxu0 %v97
    %554 = vmatpush.msra.mxu0 %v96
    %555 = vmatpush.msra.mxu0 %v95
    %556 = vmatpush.msra.mxu0 %v94
    %557 = vmatpush.msra.mxu0 %v93
    %558 = vmatpush.msra.mxu0 %v92
    %559 = vmatpush.msra.mxu0 %v91
    %560 = vmatpush.msra.mxu0 %v90
    %561 = vmatpush.msra.mxu0 %v89
    %562 = vmatpush.msra.mxu0 %v88
    %563 = vmatpush.msra.mxu0 %v87
    %564 = vmatpush.msra.mxu0 %v86
    %565 = vmatpush.msra.mxu0 %v85
    %566 = vmatmul.f32.gmra.mxu0 %v422
    %v567 = vpop.f32.mrf.mxu0
    %v568 = vadd.f32 %v548, %v567
    %569 = vdwg.mxu0
    %570 = vmatpush.msra.mxu0 %v116
    %571 = vmatpush.msra.mxu0 %v115
    %572 = vmatpush.msra.mxu0 %v114
    %573 = vmatpush.msra.mxu0 %v113
    %574 = vmatpush.msra.mxu0 %v112
    %575 = vmatpush.msra.mxu0 %v111
    %576 = vmatpush.msra.mxu0 %v110
    %577 = vmatpush.msra.mxu0 %v109
    %578 = vmatpush.msra.mxu0 %v108
    %579 = vmatpush.msra.mxu0 %v107
    %580 = vmatpush.msra.mxu0 %v106
    %581 = vmatpush.msra.mxu0 %v105
    %582 = vmatpush.msra.mxu0 %v104
    %583 = vmatpush.msra.mxu0 %v103
    %584 = vmatpush.msra.mxu0 %v102
    %585 = vmatpush.msra.mxu0 %v101
    %586 = vmatmul.f32.gmra.mxu0 %v423
    %v587 = vpop.f32.mrf.mxu0
    %v588 = vadd.f32 %v568, %v587
    %589 = vdwg.mxu0
    %590 = vmatpush.msra.mxu0 %v132
    %591 = vmatpush.msra.mxu0 %v131
    %592 = vmatpush.msra.mxu0 %v130
    %593 = vmatpush.msra.mxu0 %v129
    %594 = vmatpush.msra.mxu0 %v128
    %595 = vmatpush.msra.mxu0 %v127
    %596 = vmatpush.msra.mxu0 %v126
    %597 = vmatpush.msra.mxu0 %v125
    %598 = vmatpush.msra.mxu0 %v124
    %599 = vmatpush.msra.mxu0 %v123
    %600 = vmatpush.msra.mxu0 %v122
    %601 = vmatpush.msra.mxu0 %v121
    %602 = vmatpush.msra.mxu0 %v120
    %603 = vmatpush.msra.mxu0 %v119
    %604 = vmatpush.msra.mxu0 %v118
    %605 = vmatpush.msra.mxu0 %v117
    %606 = vmatmul.f32.gmra.mxu0 %v424
    %v607 = vpop.f32.mrf.mxu0
    %v608 = vadd.f32 %v588, %v607
    %609 = vdwg.mxu0
    %610 = vmatpush.msra.mxu0 %v148
    %611 = vmatpush.msra.mxu0 %v147
    %612 = vmatpush.msra.mxu0 %v146
    %613 = vmatpush.msra.mxu0 %v145
    %614 = vmatpush.msra.mxu0 %v144
    %615 = vmatpush.msra.mxu0 %v143
    %616 = vmatpush.msra.mxu0 %v142
    %617 = vmatpush.msra.mxu0 %v141
    %618 = vmatpush.msra.mxu0 %v140
    %619 = vmatpush.msra.mxu0 %v139
    %620 = vmatpush.msra.mxu0 %v138
    %621 = vmatpush.msra.mxu0 %v137
    %622 = vmatpush.msra.mxu0 %v136
    %623 = vmatpush.msra.mxu0 %v135
    %624 = vmatpush.msra.mxu0 %v134
    %625 = vmatpush.msra.mxu0 %v133
    %626 = vmatmul.f32.gmra.mxu0 %v425
    %v627 = vpop.f32.mrf.mxu0
    %v628 = vadd.f32 %v608, %v627
    %629 = vdwg.mxu0
    %630 = vmatpush.msra.mxu0 %v164
    %631 = vmatpush.msra.mxu0 %v163
    %632 = vmatpush.msra.mxu0 %v162
    %633 = vmatpush.msra.mxu0 %v161
    %634 = vmatpush.msra.mxu0 %v160
    %635 = vmatpush.msra.mxu0 %v159
    %636 = vmatpush.msra.mxu0 %v158
    %637 = vmatpush.msra.mxu0 %v157
    %638 = vmatpush.msra.mxu0 %v156
    %639 = vmatpush.msra.mxu0 %v155
    %640 = vmatpush.msra.mxu0 %v154
    %641 = vmatpush.msra.mxu0 %v153
    %642 = vmatpush.msra.mxu0 %v152
    %643 = vmatpush.msra.mxu0 %v151
    %644 = vmatpush.msra.mxu0 %v150
    %645 = vmatpush.msra.mxu0 %v149
    %646 = vmatmul.f32.gmra.mxu0 %v428
    %v647 = vpop.f32.mrf.mxu0
    %v648 = vadd.f32 %v628, %v647
    %649 = vdwg.mxu0
    %650 = vmatpush.msra.mxu0 %v180
    %651 = vmatpush.msra.mxu0 %v179
    %652 = vmatpush.msra.mxu0 %v178
    %653 = vmatpush.msra.mxu0 %v177
    %654 = vmatpush.msra.mxu0 %v176
    %655 = vmatpush.msra.mxu0 %v175
    %656 = vmatpush.msra.mxu0 %v174
    %657 = vmatpush.msra.mxu0 %v173
    %658 = vmatpush.msra.mxu0 %v172
    %659 = vmatpush.msra.mxu0 %v171
    %660 = vmatpush.msra.mxu0 %v170
    %661 = vmatpush.msra.mxu0 %v169
    %662 = vmatpush.msra.mxu0 %v168
    %663 = vmatpush.msra.mxu0 %v167
    %664 = vmatpush.msra.mxu0 %v166
    %665 = vmatpush.msra.mxu0 %v165
    %666 = vmatmul.f32.gmra.mxu0 %v429
    %v667 = vpop.f32.mrf.mxu0
    %v668 = vadd.f32 %v648, %v667
    %669 = vdwg.mxu0
    %670 = vmatpush.msra.mxu0 %v196
    %671 = vmatpush.msra.mxu0 %v195
    %672 = vmatpush.msra.mxu0 %v194
    %673 = vmatpush.msra.mxu0 %v193
    %674 = vmatpush.msra.mxu0 %v192
    %675 = vmatpush.msra.mxu0 %v191
    %676 = vmatpush.msra.mxu0 %v190
    %677 = vmatpush.msra.mxu0 %v189
    %678 = vmatpush.msra.mxu0 %v188
    %679 = vmatpush.msra.mxu0 %v187
    %680 = vmatpush.msra.mxu0 %v186
    %681 = vmatpush.msra.mxu0 %v185
    %682 = vmatpush.msra.mxu0 %v184
    %683 = vmatpush.msra.mxu0 %v183
    %684 = vmatpush.msra.mxu0 %v182
    %685 = vmatpush.msra.mxu0 %v181
    %686 = vmatmul.f32.gmra.mxu0 %v430
    %v687 = vpop.f32.mrf.mxu0
    %v688 = vadd.f32 %v668, %v687
    %689 = vdwg.mxu0
    %690 = vmatpush.msra.mxu0 %v212
    %691 = vmatpush.msra.mxu0 %v211
    %692 = vmatpush.msra.mxu0 %v210
    %693 = vmatpush.msra.mxu0 %v209
    %694 = vmatpush.msra.mxu0 %v208
    %695 = vmatpush.msra.mxu0 %v207
    %696 = vmatpush.msra.mxu0 %v206
    %697 = vmatpush.msra.mxu0 %v205
    %698 = vmatpush.msra.mxu0 %v204
    %699 = vmatpush.msra.mxu0 %v203
    %700 = vmatpush.msra.mxu0 %v202
    %701 = vmatpush.msra.mxu0 %v201
    %702 = vmatpush.msra.mxu0 %v200
    %703 = vmatpush.msra.mxu0 %v199
    %704 = vmatpush.msra.mxu0 %v198
    %705 = vmatpush.msra.mxu0 %v197
    %706 = vmatmul.f32.gmra.mxu0 %v431
    %v707 = vpop.f32.mrf.mxu0
    %v708 = vadd.f32 %v688, %v707
    %709 = vdwg.mxu0
    %710 = vmatpush.msra.mxu0 %v228
    %711 = vmatpush.msra.mxu0 %v227
    %712 = vmatpush.msra.mxu0 %v226
    %713 = vmatpush.msra.mxu0 %v225
    %714 = vmatpush.msra.mxu0 %v224
    %715 = vmatpush.msra.mxu0 %v223
    %716 = vmatpush.msra.mxu0 %v222
    %717 = vmatpush.msra.mxu0 %v221
    %718 = vmatpush.msra.mxu0 %v220
    %719 = vmatpush.msra.mxu0 %v219
    %720 = vmatpush.msra.mxu0 %v218
    %721 = vmatpush.msra.mxu0 %v217
    %722 = vmatpush.msra.mxu0 %v216
    %723 = vmatpush.msra.mxu0 %v215
    %724 = vmatpush.msra.mxu0 %v214
    %725 = vmatpush.msra.mxu0 %v213
    %726 = vmatmul.f32.gmra.mxu0 %v432
    %v727 = vpop.f32.mrf.mxu0
    %v728 = vadd.f32 %v708, %v727
    %729 = vdwg.mxu0
    %730 = vmatpush.msra.mxu0 %v244
    %731 = vmatpush.msra.mxu0 %v243
    %732 = vmatpush.msra.mxu0 %v242
    %733 = vmatpush.msra.mxu0 %v241
    %734 = vmatpush.msra.mxu0 %v240
    %735 = vmatpush.msra.mxu0 %v239
    %736 = vmatpush.msra.mxu0 %v238
    %737 = vmatpush.msra.mxu0 %v237
    %738 = vmatpush.msra.mxu0 %v236
    %739 = vmatpush.msra.mxu0 %v235
    %740 = vmatpush.msra.mxu0 %v234
    %741 = vmatpush.msra.mxu0 %v233
    %742 = vmatpush.msra.mxu0 %v232
    %743 = vmatpush.msra.mxu0 %v231
    %744 = vmatpush.msra.mxu0 %v230
    %745 = vmatpush.msra.mxu0 %v229
    %746 = vmatmul.f32.gmra.mxu0 %v433
    %v747 = vpop.f32.mrf.mxu0
    %v748 = vadd.f32 %v728, %v747
    %749 = vdwg.mxu0
    %750 = vmatpush.msra.mxu0 %v260
    %751 = vmatpush.msra.mxu0 %v259
    %752 = vmatpush.msra.mxu0 %v258
    %753 = vmatpush.msra.mxu0 %v257
    %754 = vmatpush.msra.mxu0 %v256
    %755 = vmatpush.msra.mxu0 %v255
    %756 = vmatpush.msra.mxu0 %v254
    %757 = vmatpush.msra.mxu0 %v253
    %758 = vmatpush.msra.mxu0 %v252
    %759 = vmatpush.msra.mxu0 %v251
    %760 = vmatpush.msra.mxu0 %v250
    %761 = vmatpush.msra.mxu0 %v249
    %762 = vmatpush.msra.mxu0 %v248
    %763 = vmatpush.msra.mxu0 %v247
    %764 = vmatpush.msra.mxu0 %v246
    %765 = vmatpush.msra.mxu0 %v245
    %766 = vmatmul.f32.gmra.mxu0 %v434
    %v767 = vpop.f32.mrf.mxu0
    %v768 = vadd.f32 %v748, %v767
    %769 = vdwg.mxu0
    %770 = vmatpush.msra.mxu0 %v276
    %771 = vmatpush.msra.mxu0 %v275
    %772 = vmatpush.msra.mxu0 %v274
    %773 = vmatpush.msra.mxu0 %v273
    %774 = vmatpush.msra.mxu0 %v272
    %775 = vmatpush.msra.mxu0 %v271
    %776 = vmatpush.msra.mxu0 %v270
    %777 = vmatpush.msra.mxu0 %v269
    %778 = vmatpush.msra.mxu0 %v268
    %779 = vmatpush.msra.mxu0 %v267
    %780 = vmatpush.msra.mxu0 %v266
    %781 = vmatpush.msra.mxu0 %v265
    %782 = vmatpush.msra.mxu0 %v264
    %783 = vmatpush.msra.mxu0 %v263
    %784 = vmatpush.msra.mxu0 %v262
    %785 = vmatpush.msra.mxu0 %v261
    %786 = vmatmul.f32.gmra.mxu0 %v435
    %v787 = vpop.f32.mrf.mxu0
    %v788 = vadd.f32 %v768, %v787
    %789 = vdwg.mxu0
    %790 = vmatpush.msra.mxu0 %v292
    %791 = vmatpush.msra.mxu0 %v291
    %792 = vmatpush.msra.mxu0 %v290
    %793 = vmatpush.msra.mxu0 %v289
    %794 = vmatpush.msra.mxu0 %v288
    %795 = vmatpush.msra.mxu0 %v287
    %796 = vmatpush.msra.mxu0 %v286
    %797 = vmatpush.msra.mxu0 %v285
    %798 = vmatpush.msra.mxu0 %v284
    %799 = vmatpush.msra.mxu0 %v283
    %800 = vmatpush.msra.mxu0 %v282
    %801 = vmatpush.msra.mxu0 %v281
    %802 = vmatpush.msra.mxu0 %v280
    %803 = vmatpush.msra.mxu0 %v279
    %804 = vmatpush.msra.mxu0 %v278
    %805 = vmatpush.msra.mxu0 %v277
    %806 = vmatmul.f32.gmra.mxu0 %v438
    %v807 = vpop.f32.mrf.mxu0
    %v808 = vadd.f32 %v788, %v807
    %809 = vdwg.mxu0
    %810 = vmatpush.msra.mxu0 %v308
    %811 = vmatpush.msra.mxu0 %v307
    %812 = vmatpush.msra.mxu0 %v306
    %813 = vmatpush.msra.mxu0 %v305
    %814 = vmatpush.msra.mxu0 %v304
    %815 = vmatpush.msra.mxu0 %v303
    %816 = vmatpush.msra.mxu0 %v302
    %817 = vmatpush.msra.mxu0 %v301
    %818 = vmatpush.msra.mxu0 %v300
    %819 = vmatpush.msra.mxu0 %v299
    %820 = vmatpush.msra.mxu0 %v298
    %821 = vmatpush.msra.mxu0 %v297
    %822 = vmatpush.msra.mxu0 %v296
    %823 = vmatpush.msra.mxu0 %v295
    %824 = vmatpush.msra.mxu0 %v294
    %825 = vmatpush.msra.mxu0 %v293
    %826 = vmatmul.f32.gmra.mxu0 %v439
    %v827 = vpop.f32.mrf.mxu0
    %v828 = vadd.f32 %v808, %v827
    %829 = vdwg.mxu0
    %830 = vmatpush.msra.mxu0 %v324
    %831 = vmatpush.msra.mxu0 %v323
    %832 = vmatpush.msra.mxu0 %v322
    %833 = vmatpush.msra.mxu0 %v321
    %834 = vmatpush.msra.mxu0 %v320
    %835 = vmatpush.msra.mxu0 %v319
    %836 = vmatpush.msra.mxu0 %v318
    %837 = vmatpush.msra.mxu0 %v317
    %838 = vmatpush.msra.mxu0 %v316
    %839 = vmatpush.msra.mxu0 %v315
    %840 = vmatpush.msra.mxu0 %v314
    %841 = vmatpush.msra.mxu0 %v313
    %842 = vmatpush.msra.mxu0 %v312
    %843 = vmatpush.msra.mxu0 %v311
    %844 = vmatpush.msra.mxu0 %v310
    %845 = vmatpush.msra.mxu0 %v309
    %846 = vmatmul.f32.gmra.mxu0 %v440
    %v847 = vpop.f32.mrf.mxu0
    %v848 = vadd.f32 %v828, %v847
    %849 = vdwg.mxu0
    %850 = vmatpush.msra.mxu0 %v340
    %851 = vmatpush.msra.mxu0 %v339
    %852 = vmatpush.msra.mxu0 %v338
    %853 = vmatpush.msra.mxu0 %v337
    %854 = vmatpush.msra.mxu0 %v336
    %855 = vmatpush.msra.mxu0 %v335
    %856 = vmatpush.msra.mxu0 %v334
    %857 = vmatpush.msra.mxu0 %v333
    %858 = vmatpush.msra.mxu0 %v332
    %859 = vmatpush.msra.mxu0 %v331
    %860 = vmatpush.msra.mxu0 %v330
    %861 = vmatpush.msra.mxu0 %v329
    %862 = vmatpush.msra.mxu0 %v328
    %863 = vmatpush.msra.mxu0 %v327
    %864 = vmatpush.msra.mxu0 %v326
    %865 = vmatpush.msra.mxu0 %v325
    %866 = vmatmul.f32.gmra.mxu0 %v441
    %v867 = vpop.f32.mrf.mxu0
    %v868 = vadd.f32 %v848, %v867
    %869 = vdwg.mxu0
    %870 = vmatpush.msra.mxu0 %v356
    %871 = vmatpush.msra.mxu0 %v355
    %872 = vmatpush.msra.mxu0 %v354
    %873 = vmatpush.msra.mxu0 %v353
    %874 = vmatpush.msra.mxu0 %v352
    %875 = vmatpush.msra.mxu0 %v351
    %876 = vmatpush.msra.mxu0 %v350
    %877 = vmatpush.msra.mxu0 %v349
    %878 = vmatpush.msra.mxu0 %v348
    %879 = vmatpush.msra.mxu0 %v347
    %880 = vmatpush.msra.mxu0 %v346
    %881 = vmatpush.msra.mxu0 %v345
    %882 = vmatpush.msra.mxu0 %v344
    %883 = vmatpush.msra.mxu0 %v343
    %884 = vmatpush.msra.mxu0 %v342
    %885 = vmatpush.msra.mxu0 %v341
    %886 = vmatmul.f32.gmra.mxu0 %v442
    %v887 = vpop.f32.mrf.mxu0
    %v888 = vadd.f32 %v868, %v887
    %889 = vdwg.mxu0
    %890 = vmatpush.msra.mxu0 %v372
    %891 = vmatpush.msra.mxu0 %v371
    %892 = vmatpush.msra.mxu0 %v370
    %893 = vmatpush.msra.mxu0 %v369
    %894 = vmatpush.msra.mxu0 %v368
    %895 = vmatpush.msra.mxu0 %v367
    %896 = vmatpush.msra.mxu0 %v366
    %897 = vmatpush.msra.mxu0 %v365
    %898 = vmatpush.msra.mxu0 %v364
    %899 = vmatpush.msra.mxu0 %v363
    %900 = vmatpush.msra.mxu0 %v362
    %901 = vmatpush.msra.mxu0 %v361
    %902 = vmatpush.msra.mxu0 %v360
    %903 = vmatpush.msra.mxu0 %v359
    %904 = vmatpush.msra.mxu0 %v358
    %905 = vmatpush.msra.mxu0 %v357
    %906 = vmatmul.f32.gmra.mxu0 %v443
    %v907 = vpop.f32.mrf.mxu0
    %v908 = vadd.f32 %v888, %v907
    %909 = vdwg.mxu0
    %910 = vmatpush.msra.mxu0 %v388
    %911 = vmatpush.msra.mxu0 %v387
    %912 = vmatpush.msra.mxu0 %v386
    %913 = vmatpush.msra.mxu0 %v385
    %914 = vmatpush.msra.mxu0 %v384
    %915 = vmatpush.msra.mxu0 %v383
    %916 = vmatpush.msra.mxu0 %v382
    %917 = vmatpush.msra.mxu0 %v381
    %918 = vmatpush.msra.mxu0 %v380
    %919 = vmatpush.msra.mxu0 %v379
    %920 = vmatpush.msra.mxu0 %v378
    %921 = vmatpush.msra.mxu0 %v377
    %922 = vmatpush.msra.mxu0 %v376
    %923 = vmatpush.msra.mxu0 %v375
    %924 = vmatpush.msra.mxu0 %v374
    %925 = vmatpush.msra.mxu0 %v373
    %926 = vmatmul.f32.gmra.mxu0 %v444
    %v927 = vpop.f32.mrf.mxu0
    %v928 = vadd.f32 %v908, %v927
    %929 = vdwg.mxu0
    %930 = vmatpush.msra.mxu0 %v404
    %931 = vmatpush.msra.mxu0 %v403
    %932 = vmatpush.msra.mxu0 %v402
    %933 = vmatpush.msra.mxu0 %v401
    %934 = vmatpush.msra.mxu0 %v400
    %935 = vmatpush.msra.mxu0 %v399
    %936 = vmatpush.msra.mxu0 %v398
    %937 = vmatpush.msra.mxu0 %v397
    %938 = vmatpush.msra.mxu0 %v396
    %939 = vmatpush.msra.mxu0 %v395
    %940 = vmatpush.msra.mxu0 %v394
    %941 = vmatpush.msra.mxu0 %v393
    %942 = vmatpush.msra.mxu0 %v392
    %943 = vmatpush.msra.mxu0 %v391
    %944 = vmatpush.msra.mxu0 %v390
    %945 = vmatpush.msra.mxu0 %v389
    %946 = vmatmul.f32.gmra.mxu0 %v445
    %v947 = vpop.f32.mrf.mxu0
    %v948 = vadd.f32 %v928, %v947
    %949 = vdwg.mxu0
    %vm950 = vcmask 74752
    %951 = vst.msk [vmem:[#allocation2] sm:$0x3] %vm950, %v948
    // Predicated region
    $region14: #{cifar10_poisoned_lr_forward.1} parent=1 // pred_check
      _
    $region15: #{cifar10_poisoned_lr_forward.1} parent=1 // pred_check_branch
      %953 = sbr.rel (0) target = $region17
    $region16: #{cifar10_poisoned_lr_forward.1} parent=1 // pred_region
      %955 = vsyncadd [#allocation3], 0
      %s957 = sshll.u32 [#allocation2], 4
      %s958 = int_to_ptr.vmem [resolvable:$true] %s957
      %s959 = sshll.u32 %s3, 4
      %s960 = int_to_ptr.hbm [resolvable:$true] %s959
      %962 = dma.vmem_to_hbm [thread:$0]  %s958, 32, %s960, [#allocation3]
    $region17: #{cifar10_poisoned_lr_forward.1} parent=1 // pred_fallthru
      _
    // Predicated region
    $region18: #{cifar10_poisoned_lr_forward.1} parent=1 // pred_check
      _
    $region19: #{cifar10_poisoned_lr_forward.1} parent=1 // pred_check_branch
      %964 = sbr.rel (0) target = $region21
    $region20: #{cifar10_poisoned_lr_forward.1} parent=1 // pred_region
      %966 = dma.done [#allocation3], 32
    $region21: #{cifar10_poisoned_lr_forward.1} parent=1 // pred_fallthru
      _
    %967 = vsyncpa [#allocation3], 1

</llo_original>
